<compile_context>
chip_gen: v6e
topology: v6e:2x2x1
jax: 0.10.0
libtpu: 0.0.40
codegen_flags: <defaults>
</compile_context>

<pallas_src>
import functools

import jax
import jax.numpy as jnp
from jax.experimental import pallas as pl
from jax.experimental.pallas import tpu as pltpu

_LANE = 128     # lane width (last dim)
_SUBLANE = 8    # sublane width (second-to-last dim)


def _round_up(x, m):
    return ((x + m - 1) // m) * m


def _leaky_relu(x, slope=0.2):
    return jnp.where(x > 0, x, slope * x)


def decoder_kernel(z_ref, w1_ref, b1_ref, w2_ref, b2_ref, w3_ref, b3_ref, out_ref):
    # z tile: (TB, Kp) bf16.  Weights: bf16 stored (in, out).  Biases: f32 (1, out).
    z = z_ref[...]

    # Layer 1: Linear + LeakyReLU(0.2)  (bf16 MXU matmul, f32 accumulate)
    h1 = jnp.dot(z, w1_ref[...], preferred_element_type=jnp.float32) + b1_ref[...]
    h1 = _leaky_relu(h1)

    # Layer 2: Linear + LeakyReLU(0.2)
    h2 = jnp.dot(h1.astype(jnp.bfloat16), w2_ref[...],
                 preferred_element_type=jnp.float32) + b2_ref[...]
    h2 = _leaky_relu(h2)

    # Output layer: Linear + sigmoid (EUP transcendental, runs off the VALU slot)
    o = jnp.dot(h2.astype(jnp.bfloat16), w3_ref[...],
                preferred_element_type=jnp.float32) + b3_ref[...]
    out_ref[...] = jax.nn.sigmoid(o).astype(out_ref.dtype)


def _pad2(a, rows, cols):
    return jnp.pad(a, ((0, rows - a.shape[0]), (0, cols - a.shape[1])))


@functools.partial(jax.jit, static_argnames=("block_b", "out_dtype"))
def decoder_forward(z, params, *, block_b=512, out_dtype=jnp.float32):
    """z: (B, latent_dim) f32.  params: weights stored pre-transposed as (in, out)."""
    w1, b1 = params["w1"], params["b1"]
    w2, b2 = params["w2"], params["b2"]
    w3, b3 = params["w3"], params["b3"]

    B, K = z.shape
    H = w1.shape[1]
    N = w3.shape[1]

    # Lane-dense padded feature dims (exact: padded lanes stay zero throughout).
    Kp = _round_up(K, _LANE)
    Hp = _round_up(H, _LANE)
    Np = _round_up(N, _LANE)

    # Batch tile: multiple of 8 sublanes, capped at block_b rows.
    TB = min(_round_up(B, _SUBLANE), _round_up(block_b, _SUBLANE))
    Bp = _round_up(B, TB)
    grid = (Bp // TB,)

    # Pad + cast matmul operands to bf16 (f32 accumulation on the MXU).
    z_p = _pad2(z, Bp, Kp).astype(jnp.bfloat16)
    w1_p = _pad2(w1, Kp, Hp).astype(jnp.bfloat16)
    w2_p = _pad2(w2, Hp, Hp).astype(jnp.bfloat16)
    w3_p = _pad2(w3, Hp, Np).astype(jnp.bfloat16)
    b1_p = _pad2(b1.reshape(1, -1), 1, Hp).astype(jnp.float32)
    b2_p = _pad2(b2.reshape(1, -1), 1, Hp).astype(jnp.float32)
    b3_p = _pad2(b3.reshape(1, -1), 1, Np).astype(jnp.float32)

    # Weights/biases: same block every grid step -> DMA'd once, stay VMEM-resident.
    resident = lambda shape: pl.BlockSpec(shape, lambda i: (0,) * len(shape))

    out_p = pl.pallas_call(
        decoder_kernel,
        out_shape=jax.ShapeDtypeStruct((Bp, Np), out_dtype),
        grid=grid,
        in_specs=[
            pl.BlockSpec((TB, Kp), lambda i: (i, 0)),   # z streams per batch tile
            resident(w1_p.shape), resident(b1_p.shape),
            resident(w2_p.shape), resident(b2_p.shape),
            resident(w3_p.shape), resident(b3_p.shape),
        ],
        out_specs=pl.BlockSpec((TB, Np), lambda i: (i, 0)),
        compiler_params=pltpu.CompilerParams(
            dimension_semantics=("parallel",),          # shard batch tiles over TCs
            vmem_limit_bytes=32 * 1024 * 1024,
        ),
    )(z_p, w1_p, b1_p, w2_p, b2_p, w3_p, b3_p)

    # Strip batch / lane padding.
    return out_p[:B, :N]


def init_params(key, latent_dim, hidden_dim, output_dim):
    """Deterministic synthetic parameter init (stored as (in, out)), f32 masters."""
    ks = jax.random.split(key, 6)
    scale = 0.1
    return {
        "w1": scale * jax.random.normal(ks[0], (latent_dim, hidden_dim), jnp.float32),
        "b1": scale * jax.random.normal(ks[1], (1, hidden_dim), jnp.float32),
        "w2": scale * jax.random.normal(ks[2], (hidden_dim, hidden_dim), jnp.float32),
        "b2": scale * jax.random.normal(ks[3], (1, hidden_dim), jnp.float32),
        "w3": scale * jax.random.normal(ks[4], (hidden_dim, output_dim), jnp.float32),
        "b3": scale * jax.random.normal(ks[5], (1, output_dim), jnp.float32),
    }


def decoder_reference(z, p):
    h1 = _leaky_relu(z @ p["w1"] + p["b1"])
    h2 = _leaky_relu(h1 @ p["w2"] + p["b2"])
    return jax.nn.sigmoid(h2 @ p["w3"] + p["b3"])


if __name__ == "__main__":
    batch, latent_dim, hidden_dim, output_dim = 8, 16, 32, 64

    key = jax.random.PRNGKey(0)
    k_z, k_p, k_z2 = jax.random.split(key, 3)
    z = jax.random.normal(k_z, (batch, latent_dim), jnp.float32)
    params = init_params(k_p, latent_dim, hidden_dim, output_dim)

    # Small demo batch (single grid step).
    x_hat = decoder_forward(z, params)
    x_hat = jax.block_until_ready(x_hat)
    ref = decoder_reference(z, params)
    assert x_hat.shape == (batch, output_dim)
    assert jnp.allclose(x_hat, ref, atol=2e-2, rtol=2e-2), float(
        jnp.max(jnp.abs(x_hat - ref)))

    # Larger ragged batch exercising the batch grid + padding/strip path.
    z_big = jax.random.normal(k_z2, (600, latent_dim), jnp.float32)
    x_big = jax.block_until_ready(decoder_forward(z_big, params, block_b=256))
    ref_big = decoder_reference(z_big, params)
    assert x_big.shape == (600, output_dim)
    assert jnp.allclose(x_big, ref_big, atol=2e-2, rtol=2e-2), float(
        jnp.max(jnp.abs(x_big - ref_big)))

    print("KERNEL_OK")
</pallas_src>

<mosaic_0001>
module attributes {stable_mosaic.version = 11 : i64} {
  func.func @decoder_kernel(%arg0: i32, %arg1: memref<8x128xbf16, #tpu.memory_space<vmem>>, %arg2: memref<128x128xbf16, #tpu.memory_space<vmem>>, %arg3: memref<1x128xf32, #tpu.memory_space<vmem>>, %arg4: memref<128x128xbf16, #tpu.memory_space<vmem>>, %arg5: memref<1x128xf32, #tpu.memory_space<vmem>>, %arg6: memref<128x128xbf16, #tpu.memory_space<vmem>>, %arg7: memref<1x128xf32, #tpu.memory_space<vmem>>, %arg8: memref<8x128xf32, #tpu.memory_space<vmem>>) attributes {dimension_semantics = [#tpu.dimension_semantics<parallel>], iteration_bounds = array<i64: 1>, scalar_prefetch = 0 : i64, scratch_operands = 0 : i64, tpu.core_type = #tpu.core_type<tc>, window_params = [{transform_indices = @transform_0, window_bounds = array<i64: 8, 128>}, {pipeline_mode = #tpu.pipeline_mode<synchronous>, transform_indices = @transform_1, window_bounds = array<i64: 128, 128>}, {pipeline_mode = #tpu.pipeline_mode<synchronous>, transform_indices = @transform_2, window_bounds = array<i64: 1, 128>}, {pipeline_mode = #tpu.pipeline_mode<synchronous>, transform_indices = @transform_3, window_bounds = array<i64: 128, 128>}, {pipeline_mode = #tpu.pipeline_mode<synchronous>, transform_indices = @transform_4, window_bounds = array<i64: 1, 128>}, {pipeline_mode = #tpu.pipeline_mode<synchronous>, transform_indices = @transform_5, window_bounds = array<i64: 128, 128>}, {pipeline_mode = #tpu.pipeline_mode<synchronous>, transform_indices = @transform_6, window_bounds = array<i64: 1, 128>}, {transform_indices = @transform_7, window_bounds = array<i64: 8, 128>}]} {
    %c0 = arith.constant 0 : index
    %c0_0 = arith.constant 0 : index
    %0 = vector.load %arg1[%c0, %c0_0] : memref<8x128xbf16, #tpu.memory_space<vmem>>, vector<8x128xbf16>
    %c0_1 = arith.constant 0 : index
    %c0_2 = arith.constant 0 : index
    %1 = vector.load %arg2[%c0_1, %c0_2] : memref<128x128xbf16, #tpu.memory_space<vmem>>, vector<128x128xbf16>
    %cst = arith.constant dense<0.000000e+00> : vector<8x128xf32>
    %2 = tpu.matmul %0, %1, %cst {dimension_numbers = #tpu.dot_dimension_numbers<[1], [0], [0], [1], [0, 0, 1, 1], [], []>} : vector<8x128xbf16>, vector<128x128xbf16>, vector<8x128xf32> -> vector<8x128xf32>
    %c0_3 = arith.constant 0 : index
    %c0_4 = arith.constant 0 : index
    %3 = vector.load %arg3[%c0_3, %c0_4] : memref<1x128xf32, #tpu.memory_space<vmem>>, vector<1x128xf32>
    %4 = vector.broadcast %3 : vector<1x128xf32> to vector<8x128xf32>
    %5 = arith.addf %2, %4 : vector<8x128xf32>
    %cst_5 = arith.constant 0.000000e+00 : f32
    %6 = vector.broadcast %cst_5 : f32 to vector<8x128xf32>
    %7 = arith.cmpf ogt, %5, %6 : vector<8x128xf32>
    %cst_6 = arith.constant 2.000000e-01 : f32
    %8 = vector.broadcast %cst_6 : f32 to vector<8x128xf32>
    %9 = arith.mulf %8, %5 : vector<8x128xf32>
    %10 = arith.select %7, %5, %9 : vector<8x128xi1>, vector<8x128xf32>
    %11 = arith.truncf %10 : vector<8x128xf32> to vector<8x128xbf16>
    %c0_7 = arith.constant 0 : index
    %c0_8 = arith.constant 0 : index
    %12 = vector.load %arg4[%c0_7, %c0_8] : memref<128x128xbf16, #tpu.memory_space<vmem>>, vector<128x128xbf16>
    %cst_9 = arith.constant dense<0.000000e+00> : vector<8x128xf32>
    %13 = tpu.matmul %11, %12, %cst_9 {dimension_numbers = #tpu.dot_dimension_numbers<[1], [0], [0], [1], [0, 0, 1, 1], [], []>} : vector<8x128xbf16>, vector<128x128xbf16>, vector<8x128xf32> -> vector<8x128xf32>
    %c0_10 = arith.constant 0 : index
    %c0_11 = arith.constant 0 : index
    %14 = vector.load %arg5[%c0_10, %c0_11] : memref<1x128xf32, #tpu.memory_space<vmem>>, vector<1x128xf32>
    %15 = vector.broadcast %14 : vector<1x128xf32> to vector<8x128xf32>
    %16 = arith.addf %13, %15 : vector<8x128xf32>
    %cst_12 = arith.constant 0.000000e+00 : f32
    %17 = vector.broadcast %cst_12 : f32 to vector<8x128xf32>
    %18 = arith.cmpf ogt, %16, %17 : vector<8x128xf32>
    %cst_13 = arith.constant 2.000000e-01 : f32
    %19 = vector.broadcast %cst_13 : f32 to vector<8x128xf32>
    %20 = arith.mulf %19, %16 : vector<8x128xf32>
    %21 = arith.select %18, %16, %20 : vector<8x128xi1>, vector<8x128xf32>
    %22 = arith.truncf %21 : vector<8x128xf32> to vector<8x128xbf16>
    %c0_14 = arith.constant 0 : index
    %c0_15 = arith.constant 0 : index
    %23 = vector.load %arg6[%c0_14, %c0_15] : memref<128x128xbf16, #tpu.memory_space<vmem>>, vector<128x128xbf16>
    %cst_16 = arith.constant dense<0.000000e+00> : vector<8x128xf32>
    %24 = tpu.matmul %22, %23, %cst_16 {dimension_numbers = #tpu.dot_dimension_numbers<[1], [0], [0], [1], [0, 0, 1, 1], [], []>} : vector<8x128xbf16>, vector<128x128xbf16>, vector<8x128xf32> -> vector<8x128xf32>
    %c0_17 = arith.constant 0 : index
    %c0_18 = arith.constant 0 : index
    %25 = vector.load %arg7[%c0_17, %c0_18] : memref<1x128xf32, #tpu.memory_space<vmem>>, vector<1x128xf32>
    %26 = vector.broadcast %25 : vector<1x128xf32> to vector<8x128xf32>
    %27 = arith.addf %24, %26 : vector<8x128xf32>
    %28 = arith.negf %27 : vector<8x128xf32>
    %29 = math.exp %28 : vector<8x128xf32>
    %cst_19 = arith.constant 1.000000e+00 : f32
    %30 = vector.broadcast %cst_19 : f32 to vector<8x128xf32>
    %31 = arith.addf %30, %29 : vector<8x128xf32>
    %32 = arith.divf %30, %31 : vector<8x128xf32>
    %c0_20 = arith.constant 0 : index
    %c0_21 = arith.constant 0 : index
    %33 = vector.load %arg8[%c0_20, %c0_21] : memref<8x128xf32, #tpu.memory_space<vmem>>, vector<8x128xf32>
    tpu.vector_store %arg8[%c0_20, %c0_21], %32 {strides = array<i32>} : memref<8x128xf32, #tpu.memory_space<vmem>>, vector<8x128xf32>,
    return
  }
  func.func @transform_0(%arg0: i32) -> (i32, i32) {
    %c0_i32 = arith.constant 0 : i32
    %c0_i32_0 = arith.constant 0 : i32
    return %arg0, %c0_i32 : i32, i32
  }
  func.func @transform_1(%arg0: i32) -> (i32, i32) {
    %c0_i32 = arith.constant 0 : i32
    %c0_i32_0 = arith.constant 0 : i32
    %c0_i32_1 = arith.constant 0 : i32
    return %c0_i32, %c0_i32_0 : i32, i32
  }
  func.func @transform_2(%arg0: i32) -> (i32, i32) {
    %c0_i32 = arith.constant 0 : i32
    %c0_i32_0 = arith.constant 0 : i32
    %c0_i32_1 = arith.constant 0 : i32
    return %c0_i32, %c0_i32_0 : i32, i32
  }
  func.func @transform_3(%arg0: i32) -> (i32, i32) {
    %c0_i32 = arith.constant 0 : i32
    %c0_i32_0 = arith.constant 0 : i32
    %c0_i32_1 = arith.constant 0 : i32
    return %c0_i32, %c0_i32_0 : i32, i32
  }
  func.func @transform_4(%arg0: i32) -> (i32, i32) {
    %c0_i32 = arith.constant 0 : i32
    %c0_i32_0 = arith.constant 0 : i32
    %c0_i32_1 = arith.constant 0 : i32
    return %c0_i32, %c0_i32_0 : i32, i32
  }
  func.func @transform_5(%arg0: i32) -> (i32, i32) {
    %c0_i32 = arith.constant 0 : i32
    %c0_i32_0 = arith.constant 0 : i32
    %c0_i32_1 = arith.constant 0 : i32
    return %c0_i32, %c0_i32_0 : i32, i32
  }
  func.func @transform_6(%arg0: i32) -> (i32, i32) {
    %c0_i32 = arith.constant 0 : i32
    %c0_i32_0 = arith.constant 0 : i32
    %c0_i32_1 = arith.constant 0 : i32
    return %c0_i32, %c0_i32_0 : i32, i32
  }
  func.func @transform_7(%arg0: i32) -> (i32, i32) {
    %c0_i32 = arith.constant 0 : i32
    %c0_i32_0 = arith.constant 0 : i32
    return %arg0, %c0_i32 : i32, i32
  }
}

</mosaic_0001>

<llo_original>
// kernel: decoder_forward.1
$region0: #{decoder_forward.1}
  #allocation0 [shape = 'u32[]', space=smem, size = 0x4, offset = 0x4, fixed_abs, tag = 'smem constant byte address 0x4 - core index']
  #allocation1 [shape = 'u32[144,128]{1,0:T(1,128)}', space=vmem, size = 0x12000, scoped, tag = 'internal scratch']
  %s0 = inlined_call_operand.vmem [shape: bf16[8,128], index: 0, kind: input, shape index: {}]
  %s1 = inlined_call_operand.vmem [shape: bf16[128,128], index: 1, kind: input, shape index: {}]
  %s2 = inlined_call_operand.vmem [shape: f32[1,128], index: 2, kind: input, shape index: {}]
  %s3 = inlined_call_operand.vmem [shape: bf16[128,128], index: 3, kind: input, shape index: {}]
  %s4 = inlined_call_operand.vmem [shape: f32[1,128], index: 4, kind: input, shape index: {}]
  %s5 = inlined_call_operand.vmem [shape: bf16[128,128], index: 5, kind: input, shape index: {}]
  %s6 = inlined_call_operand.vmem [shape: f32[1,128], index: 6, kind: input, shape index: {}]
  %s7 = inlined_call_operand.hbm [shape: f32[8,128], index: 7, kind: output, shape index: {}]
  %s8 = sld [smem:[#allocation0]]
  $region38: #{decoder_forward.1} parent=0
    _
  %s10 = ssub.s32 1, %s8
  %s11 = scalar_select 0, %s10, %s8
  $region1: #{decoder_forward.1} parent=0
    #allocation2 [shape = 'u8[4096]{0}', space=vmem, size = 0x1000, scoped, tag = 'output window, operand 0, single buffered']
    #allocation3 [shape = 's32[1]{0}', space=sflag, size = 0x4, scoped, tag = 'scoped memory for decoder_forward.1']
    %12 = vsyncpa [#allocation3], 0
    // Predicated region
    $region2: #{decoder_forward.1} parent=1 // pred_check
      _
    $region3: #{decoder_forward.1} parent=1 // pred_check_branch
      %14 = sbr.rel (0) target = $region5
    $region4: #{decoder_forward.1} parent=1 // pred_region
      _
    $region5: #{decoder_forward.1} parent=1 // pred_fallthru
      _
    // Predicated region
    $region6: #{decoder_forward.1} parent=1 // pred_check
      _
    $region7: #{decoder_forward.1} parent=1 // pred_check_branch
      %16 = sbr.rel (0) target = $region9
    $region8: #{decoder_forward.1} parent=1 // pred_region
      _
    $region9: #{decoder_forward.1} parent=1 // pred_fallthru
      _
    // Predicated region
    $region10: #{decoder_forward.1} parent=1 // pred_check
      _
    $region11: #{decoder_forward.1} parent=1 // pred_check_branch
      %18 = sbr.rel (0) target = $region13
    $region12: #{decoder_forward.1} parent=1 // pred_region
      _
    $region13: #{decoder_forward.1} parent=1 // pred_fallthru
      _
    // Predicated region
    $region14: #{decoder_forward.1} parent=1 // pred_check
      _
    $region15: #{decoder_forward.1} parent=1 // pred_check_branch
      %20 = sbr.rel (0) target = $region17
    $region16: #{decoder_forward.1} parent=1 // pred_region
      _
    $region17: #{decoder_forward.1} parent=1 // pred_fallthru
      _
    // Predicated region
    $region18: #{decoder_forward.1} parent=1 // pred_check
      _
    $region19: #{decoder_forward.1} parent=1 // pred_check_branch
      %22 = sbr.rel (0) target = $region21
    $region20: #{decoder_forward.1} parent=1 // pred_region
      _
    $region21: #{decoder_forward.1} parent=1 // pred_fallthru
      _
    // Predicated region
    $region22: #{decoder_forward.1} parent=1 // pred_check
      _
    $region23: #{decoder_forward.1} parent=1 // pred_check_branch
      %24 = sbr.rel (0) target = $region25
    $region24: #{decoder_forward.1} parent=1 // pred_region
      _
    $region25: #{decoder_forward.1} parent=1 // pred_fallthru
      _
    // Predicated region
    $region26: #{decoder_forward.1} parent=1 // pred_check
      _
    $region27: #{decoder_forward.1} parent=1 // pred_check_branch
      %26 = sbr.rel (0) target = $region29
    $region28: #{decoder_forward.1} parent=1 // pred_region
      _
    $region29: #{decoder_forward.1} parent=1 // pred_fallthru
      _
    %v28 = vld [vmem:[%s0] sm:$0xf]
    %v29 = vld [vmem:[%s1] sm:$0xf]
    %v30 = vld [vmem:[%s1 + $0x4] sm:$0xf]
    %v31 = vld [vmem:[%s1 + $0x8] sm:$0xf]
    %v32 = vld [vmem:[%s1 + $0xc] sm:$0xf]
    %v33 = vld [vmem:[%s1 + $0x10] sm:$0xf]
    %v34 = vld [vmem:[%s1 + $0x14] sm:$0xf]
    %v35 = vld [vmem:[%s1 + $0x18] sm:$0xf]
    %v36 = vld [vmem:[%s1 + $0x1c] sm:$0xf]
    %v37 = vld [vmem:[%s1 + $0x20] sm:$0xf]
    %v38 = vld [vmem:[%s1 + $0x24] sm:$0xf]
    %v39 = vld [vmem:[%s1 + $0x28] sm:$0xf]
    %v40 = vld [vmem:[%s1 + $0x2c] sm:$0xf]
    %v41 = vld [vmem:[%s1 + $0x30] sm:$0xf]
    %v42 = vld [vmem:[%s1 + $0x34] sm:$0xf]
    %v43 = vld [vmem:[%s1 + $0x38] sm:$0xf]
    %v44 = vld [vmem:[%s1 + $0x3c] sm:$0xf]
    %v45 = vld [vmem:[%s2] sm:$0x1]
    %v47 = vlaneseq
    %v48 = vshrl.u32 %v47, 7
    %v49 = vsub.s32 0, %v48
    %v50 = vrot.slane %v45, %v49
    %v68 = vunpack.c.l.b16 %v29
    %v69 = vunpack.c.l.b16 %v30
    %v70 = vunpack.c.l.b16 %v31
    %v71 = vunpack.c.l.b16 %v32
    %v72 = vunpack.c.l.b16 %v33
    %v73 = vunpack.c.l.b16 %v34
    %v74 = vunpack.c.l.b16 %v35
    %v75 = vunpack.c.l.b16 %v36
    %v76 = vunpack.c.l.b16 %v37
    %v77 = vunpack.c.l.b16 %v38
    %v78 = vunpack.c.l.b16 %v39
    %v79 = vunpack.c.l.b16 %v40
    %v80 = vunpack.c.l.b16 %v41
    %v81 = vunpack.c.l.b16 %v42
    %v82 = vunpack.c.l.b16 %v43
    %v83 = vunpack.c.l.b16 %v44
    %v84 = vpack.c.b16 %v69, %v68
    %v85 = vpack.c.b16 %v71, %v70
    %v86 = vpack.c.b16 %v73, %v72
    %v87 = vpack.c.b16 %v75, %v74
    %v88 = vpack.c.b16 %v77, %v76
    %v89 = vpack.c.b16 %v79, %v78
    %v90 = vpack.c.b16 %v81, %v80
    %v91 = vpack.c.b16 %v83, %v82
    %100 = vmatprep.subr.bf16.mxu0 0
    %101 = vmatpush1.bf16.msra.mxu0 %v91
    %102 = vmatprep.subr.bf16.mxu0 0
    %103 = vmatpush1.bf16.msra.mxu0 %v90
    %104 = vmatprep.subr.bf16.mxu0 0
    %105 = vmatpush1.bf16.msra.mxu0 %v89
    %106 = vmatprep.subr.bf16.mxu0 0
    %107 = vmatpush1.bf16.msra.mxu0 %v88
    %108 = vmatprep.subr.bf16.mxu0 0
    %109 = vmatpush1.bf16.msra.mxu0 %v87
    %110 = vmatprep.subr.bf16.mxu0 0
    %111 = vmatpush1.bf16.msra.mxu0 %v86
    %112 = vmatprep.subr.bf16.mxu0 0
    %113 = vmatpush1.bf16.msra.mxu0 %v85
    %114 = vmatprep.subr.bf16.mxu0 0
    %115 = vmatpush1.bf16.msra.mxu0 %v84
    %116 = vmatprep.subr.bf16.mxu0 0
    %117 = vmatpush2.bf16.msra.mxu0 0
    %118 = vmatprep.subr.bf16.mxu0 0
    %119 = vmatpush2.bf16.msra.mxu0 0
    %120 = vmatprep.subr.bf16.mxu0 0
    %121 = vmatpush2.bf16.msra.mxu0 0
    %122 = vmatprep.subr.bf16.mxu0 0
    %123 = vmatpush2.bf16.msra.mxu0 0
    %124 = vmatprep.subr.bf16.mxu0 0
    %125 = vmatpush2.bf16.msra.mxu0 0
    %126 = vmatprep.subr.bf16.mxu0 0
    %127 = vmatpush2.bf16.msra.mxu0 0
    %128 = vmatprep.subr.bf16.mxu0 0
    %129 = vmatpush2.bf16.msra.mxu0 0
    %130 = vmatprep.subr.bf16.mxu0 0
    %131 = vmatpush2.bf16.msra.mxu0 0
    %132 = vmatprep.mubr.bf16.mxu0 0
    %133 = vmatmul.mubr.bf16.gmra.mxu0 %v28
    %v134 = vpop.f32.mrf.mxu0
    %v135 = vadd.f32 %v50, %v134
    %v136 = vpop.f32.mrf.mxu0
    %v137 = vpop.f32.mrf.mxu0
    %v138 = vpop.f32.mrf.mxu0
    %139 = vdwg.mxu0
    %vm140 = vcmp.gt.f32.partialorder %v135, 0.0
    %v141 = vmul.f32 %v135, 0.2
    %v142 = vsel %vm140, %v135, %v141
    %v143 = vpack.c.bf16 %v142, %v142
    %v144 = vld [vmem:[%s3] sm:$0xf]
    %v145 = vld [vmem:[%s3 + $0x4] sm:$0xf]
    %v146 = vld [vmem:[%s3 + $0x8] sm:$0xf]
    %v147 = vld [vmem:[%s3 + $0xc] sm:$0xf]
    %v148 = vld [vmem:[%s3 + $0x10] sm:$0xf]
    %v149 = vld [vmem:[%s3 + $0x14] sm:$0xf]
    %v150 = vld [vmem:[%s3 + $0x18] sm:$0xf]
    %v151 = vld [vmem:[%s3 + $0x1c] sm:$0xf]
    %v152 = vld [vmem:[%s3 + $0x20] sm:$0xf]
    %v153 = vld [vmem:[%s3 + $0x24] sm:$0xf]
    %v154 = vld [vmem:[%s3 + $0x28] sm:$0xf]
    %v155 = vld [vmem:[%s3 + $0x2c] sm:$0xf]
    %v156 = vld [vmem:[%s3 + $0x30] sm:$0xf]
    %v157 = vld [vmem:[%s3 + $0x34] sm:$0xf]
    %v158 = vld [vmem:[%s3 + $0x38] sm:$0xf]
    %v159 = vld [vmem:[%s3 + $0x3c] sm:$0xf]
    %v160 = vld [vmem:[%s4] sm:$0x1]
    %v162 = vlaneseq
    %v163 = vshrl.u32 %v162, 7
    %v164 = vsub.s32 0, %v163
    %v165 = vrot.slane %v160, %v164
    %v183 = vunpack.c.l.b16 %v144
    %v184 = vunpack.c.l.b16 %v145
    %v185 = vunpack.c.l.b16 %v146
    %v186 = vunpack.c.l.b16 %v147
    %v187 = vunpack.c.l.b16 %v148
    %v188 = vunpack.c.l.b16 %v149
    %v189 = vunpack.c.l.b16 %v150
    %v190 = vunpack.c.l.b16 %v151
    %v191 = vunpack.c.l.b16 %v152
    %v192 = vunpack.c.l.b16 %v153
    %v193 = vunpack.c.l.b16 %v154
    %v194 = vunpack.c.l.b16 %v155
    %v195 = vunpack.c.l.b16 %v156
    %v196 = vunpack.c.l.b16 %v157
    %v197 = vunpack.c.l.b16 %v158
    %v198 = vunpack.c.l.b16 %v159
    %v199 = vpack.c.b16 %v184, %v183
    %v200 = vpack.c.b16 %v186, %v185
    %v201 = vpack.c.b16 %v188, %v187
    %v202 = vpack.c.b16 %v190, %v189
    %v203 = vpack.c.b16 %v192, %v191
    %v204 = vpack.c.b16 %v194, %v193
    %v205 = vpack.c.b16 %v196, %v195
    %v206 = vpack.c.b16 %v198, %v197
    %215 = vmatprep.subr.bf16.mxu0 0
    %216 = vmatpush1.bf16.msra.mxu0 %v206
    %217 = vmatprep.subr.bf16.mxu0 0
    %218 = vmatpush1.bf16.msra.mxu0 %v205
    %219 = vmatprep.subr.bf16.mxu0 0
    %220 = vmatpush1.bf16.msra.mxu0 %v204
    %221 = vmatprep.subr.bf16.mxu0 0
    %222 = vmatpush1.bf16.msra.mxu0 %v203
    %223 = vmatprep.subr.bf16.mxu0 0
    %224 = vmatpush1.bf16.msra.mxu0 %v202
    %225 = vmatprep.subr.bf16.mxu0 0
    %226 = vmatpush1.bf16.msra.mxu0 %v201
    %227 = vmatprep.subr.bf16.mxu0 0
    %228 = vmatpush1.bf16.msra.mxu0 %v200
    %229 = vmatprep.subr.bf16.mxu0 0
    %230 = vmatpush1.bf16.msra.mxu0 %v199
    %231 = vmatprep.subr.bf16.mxu0 0
    %232 = vmatpush2.bf16.msra.mxu0 0
    %233 = vmatprep.subr.bf16.mxu0 0
    %234 = vmatpush2.bf16.msra.mxu0 0
    %235 = vmatprep.subr.bf16.mxu0 0
    %236 = vmatpush2.bf16.msra.mxu0 0
    %237 = vmatprep.subr.bf16.mxu0 0
    %238 = vmatpush2.bf16.msra.mxu0 0
    %239 = vmatprep.subr.bf16.mxu0 0
    %240 = vmatpush2.bf16.msra.mxu0 0
    %241 = vmatprep.subr.bf16.mxu0 0
    %242 = vmatpush2.bf16.msra.mxu0 0
    %243 = vmatprep.subr.bf16.mxu0 0
    %244 = vmatpush2.bf16.msra.mxu0 0
    %245 = vmatprep.subr.bf16.mxu0 0
    %246 = vmatpush2.bf16.msra.mxu0 0
    %247 = vmatprep.mubr.bf16.mxu0 0
    %248 = vmatmul.mubr.bf16.gmra.mxu0 %v143
    %v249 = vpop.f32.mrf.mxu0
    %v250 = vadd.f32 %v165, %v249
    %v251 = vpop.f32.mrf.mxu0
    %v252 = vpop.f32.mrf.mxu0
    %v253 = vpop.f32.mrf.mxu0
    %254 = vdwg.mxu0
    %vm255 = vcmp.gt.f32.partialorder %v250, 0.0
    %v256 = vmul.f32 %v250, 0.2
    %v257 = vsel %vm255, %v250, %v256
    %v258 = vpack.c.bf16 %v257, %v257
    %v259 = vld [vmem:[%s5] sm:$0xf]
    %v260 = vld [vmem:[%s5 + $0x4] sm:$0xf]
    %v261 = vld [vmem:[%s5 + $0x8] sm:$0xf]
    %v262 = vld [vmem:[%s5 + $0xc] sm:$0xf]
    %v263 = vld [vmem:[%s5 + $0x10] sm:$0xf]
    %v264 = vld [vmem:[%s5 + $0x14] sm:$0xf]
    %v265 = vld [vmem:[%s5 + $0x18] sm:$0xf]
    %v266 = vld [vmem:[%s5 + $0x1c] sm:$0xf]
    %v267 = vld [vmem:[%s5 + $0x20] sm:$0xf]
    %v268 = vld [vmem:[%s5 + $0x24] sm:$0xf]
    %v269 = vld [vmem:[%s5 + $0x28] sm:$0xf]
    %v270 = vld [vmem:[%s5 + $0x2c] sm:$0xf]
    %v271 = vld [vmem:[%s5 + $0x30] sm:$0xf]
    %v272 = vld [vmem:[%s5 + $0x34] sm:$0xf]
    %v273 = vld [vmem:[%s5 + $0x38] sm:$0xf]
    %v274 = vld [vmem:[%s5 + $0x3c] sm:$0xf]
    %v275 = vld [vmem:[%s6] sm:$0x1]
    %v277 = vlaneseq
    %v278 = vshrl.u32 %v277, 7
    %v279 = vsub.s32 0, %v278
    %v280 = vrot.slane %v275, %v279
    %v298 = vunpack.c.l.b16 %v259
    %v299 = vunpack.c.l.b16 %v260
    %v300 = vunpack.c.l.b16 %v261
    %v301 = vunpack.c.l.b16 %v262
    %v302 = vunpack.c.l.b16 %v263
    %v303 = vunpack.c.l.b16 %v264
    %v304 = vunpack.c.l.b16 %v265
    %v305 = vunpack.c.l.b16 %v266
    %v306 = vunpack.c.l.b16 %v267
    %v307 = vunpack.c.l.b16 %v268
    %v308 = vunpack.c.l.b16 %v269
    %v309 = vunpack.c.l.b16 %v270
    %v310 = vunpack.c.l.b16 %v271
    %v311 = vunpack.c.l.b16 %v272
    %v312 = vunpack.c.l.b16 %v273
    %v313 = vunpack.c.l.b16 %v274
    %v314 = vpack.c.b16 %v299, %v298
    %v315 = vpack.c.b16 %v301, %v300
    %v316 = vpack.c.b16 %v303, %v302
    %v317 = vpack.c.b16 %v305, %v304
    %v318 = vpack.c.b16 %v307, %v306
    %v319 = vpack.c.b16 %v309, %v308
    %v320 = vpack.c.b16 %v311, %v310
    %v321 = vpack.c.b16 %v313, %v312
    %330 = vmatprep.subr.bf16.mxu0 0
    %331 = vmatpush1.bf16.msra.mxu0 %v321
    %332 = vmatprep.subr.bf16.mxu0 0
    %333 = vmatpush1.bf16.msra.mxu0 %v320
    %334 = vmatprep.subr.bf16.mxu0 0
    %335 = vmatpush1.bf16.msra.mxu0 %v319
    %336 = vmatprep.subr.bf16.mxu0 0
    %337 = vmatpush1.bf16.msra.mxu0 %v318
    %338 = vmatprep.subr.bf16.mxu0 0
    %339 = vmatpush1.bf16.msra.mxu0 %v317
    %340 = vmatprep.subr.bf16.mxu0 0
    %341 = vmatpush1.bf16.msra.mxu0 %v316
    %342 = vmatprep.subr.bf16.mxu0 0
    %343 = vmatpush1.bf16.msra.mxu0 %v315
    %344 = vmatprep.subr.bf16.mxu0 0
    %345 = vmatpush1.bf16.msra.mxu0 %v314
    %346 = vmatprep.subr.bf16.mxu0 0
    %347 = vmatpush2.bf16.msra.mxu0 0
    %348 = vmatprep.subr.bf16.mxu0 0
    %349 = vmatpush2.bf16.msra.mxu0 0
    %350 = vmatprep.subr.bf16.mxu0 0
    %351 = vmatpush2.bf16.msra.mxu0 0
    %352 = vmatprep.subr.bf16.mxu0 0
    %353 = vmatpush2.bf16.msra.mxu0 0
    %354 = vmatprep.subr.bf16.mxu0 0
    %355 = vmatpush2.bf16.msra.mxu0 0
    %356 = vmatprep.subr.bf16.mxu0 0
    %357 = vmatpush2.bf16.msra.mxu0 0
    %358 = vmatprep.subr.bf16.mxu0 0
    %359 = vmatpush2.bf16.msra.mxu0 0
    %360 = vmatprep.subr.bf16.mxu0 0
    %361 = vmatpush2.bf16.msra.mxu0 0
    %362 = vmatprep.mubr.bf16.mxu0 0
    %363 = vmatmul.mubr.bf16.gmra.mxu0 %v258
    %v364 = vpop.f32.mrf.mxu0
    %v365 = vadd.f32 %v280, %v364
    %v366 = vpop.f32.mrf.mxu0
    %v367 = vpop.f32.mrf.mxu0
    %v368 = vpop.f32.mrf.mxu0
    %369 = vdwg.mxu0
    %v370 = vxor.u32 %v365, 2147483648
    %v371 = vmul.f32 %v370, 1.442695
    %v372 = vpow.pop %v371
    %v373 = vadd.f32 %v372, 1.0
    %v374 = vrcp.pop %v373
    %v375 = vmul.f32 1.0, %v374
    %376 = vst [vmem:[#allocation2] sm:$0xff] %v375
    // Predicated region
    $region30: #{decoder_forward.1} parent=1 // pred_check
      _
    $region31: #{decoder_forward.1} parent=1 // pred_check_branch
      %378 = sbr.rel (0) target = $region33
    $region32: #{decoder_forward.1} parent=1 // pred_region
      %s380 = ssub.s32 128, 128
      %381 = vsyncadd [#allocation3], %s380
      %s383 = sshll.u32 [#allocation2], 4
      %s384 = int_to_ptr.vmem [resolvable:$true] %s383
      %386 = dma.vmem_to_hbm [thread:$0]  %s384, 128, %s7, [#allocation3]
    $region33: #{decoder_forward.1} parent=1 // pred_fallthru
      _
    // Predicated region
    $region34: #{decoder_forward.1} parent=1 // pred_check
      _
    $region35: #{decoder_forward.1} parent=1 // pred_check_branch
      %388 = sbr.rel (0) target = $region37
    $region36: #{decoder_forward.1} parent=1 // pred_region
      %389 = dma.done [#allocation3], 128
    $region37: #{decoder_forward.1} parent=1 // pred_fallthru
      _
    %390 = vsyncpa [#allocation3], 1

</llo_original>
